<compile_context>
chip_gen: v7x
topology: tpu7x:2x2x1
jax: 0.10.0
libtpu: 0.0.40
codegen_flags: <defaults>
</compile_context>

<pallas_src>
import math

import jax
import jax.numpy as jnp
from jax.experimental import pallas as pl
from jax.experimental.pallas import tpu as pltpu


LEAKY_SLOPE = 0.01  # torch.nn.LeakyReLU default negative_slope


def _round_up(n, m):
    return pl.cdiv(n, m) * m


def _make_ux_kernel(n_linear, compute_dtype):
    """MLP kernel in transposed layout.

    Ref order: x_ref (Din, tm), then w0, b0, ..., w_{L-1}, b_{L-1}, out_ref.
    Weights are in torch (out, in) layout; biases are (out, 1).
    """

    def kernel(x_ref, *refs):
        out_ref = refs[-1]
        params = refs[:-1]
        assert len(params) == 2 * n_linear

        h = x_ref[...].astype(jnp.float32)            # (Din, tm)
        for i in range(n_linear):
            w = params[2 * i][...]                    # (out, in), compute_dtype
            b = params[2 * i + 1][...]                # (out, 1), f32
            # MXU: M = out (<= hidden), K = in, N = tm (lane-dense), f32 acc.
            h = jnp.dot(w, h.astype(compute_dtype),
                        preferred_element_type=jnp.float32) + b
            if i < n_linear - 1:
                # LeakyReLU as a single VPU max.
                h = jnp.maximum(h, LEAKY_SLOPE * h)

        out_ref[...] = h.astype(out_ref.dtype)        # (Dout, tm) lane-dense

    return kernel


def ux_forward(x, weights, biases, *, tm=None, use_bf16=True):
    """Forward pass of Ux.

    Args:
        x:        (..., input_dim) float32
        weights:  list of torch-layout weights [(out_i, in_i)]
        biases:   list of biases [(out_i,)]
        tm:       row tile (multiple of 128); default min(1024, round_up(N,128))
        use_bf16: cast matmul inputs to bf16 (f32 accumulation)

    Returns:
        (..., output_dim) float32  (output_dim == input_dim for Ux)
    """
    s = x.shape
    din = s[-1]
    n = 1
    for d in s[:-1]:
        n *= int(d)

    x2 = x.reshape(n, din).astype(jnp.float32)

    if tm is None:
        tm = min(1024, _round_up(n, 128))
    tm = _round_up(tm, 128)
    n_pad = _round_up(n, tm)
    if n_pad != n:
        x2 = jnp.pad(x2, ((0, n_pad - n), (0, 0)))

    # Layout plumbing: rows -> lanes.
    xT = x2.T                                          # (din, n_pad)

    compute_dtype = jnp.bfloat16 if use_bf16 else jnp.float32
    ws = [jnp.asarray(w, jnp.float32).astype(compute_dtype) for w in weights]
    bs = [jnp.asarray(b, jnp.float32).reshape(-1, 1) for b in biases]

    n_lin = len(ws)
    d_out = ws[-1].shape[0]

    kernel = _make_ux_kernel(n_lin, compute_dtype)

    # x / out are tiled over the lane (row) axis; params are full resident blocks.
    in_specs = [pl.BlockSpec((din, tm), lambda i: (0, i))]
    param_args = []
    for w, b in zip(ws, bs):
        in_specs.append(pl.BlockSpec(w.shape, lambda i: (0, 0)))
        in_specs.append(pl.BlockSpec(b.shape, lambda i: (0, 0)))
        param_args.extend([w, b])

    out_spec = pl.BlockSpec((d_out, tm), lambda i: (0, i))

    outT = pl.pallas_call(
        kernel,
        out_shape=jax.ShapeDtypeStruct((d_out, n_pad), jnp.float32),
        grid_spec=pltpu.PrefetchScalarGridSpec(
            num_scalar_prefetch=0,
            grid=(n_pad // tm,),
            in_specs=in_specs,
            out_specs=out_spec,
        ),
        compiler_params=pltpu.CompilerParams(
            dimension_semantics=("parallel",),   # lets v7x shard rows across TCs
        ),
    )(xT, *param_args)

    out = outT.T[:n]                                   # (n, d_out)
    return out.reshape(s[:-1] + (d_out,))


def init_params(key, input_dim, hidden_dim, n_layers):
    """Synthetic parameters matching Ux.__init__ (batch_norm=False) shapes."""
    dims = [(hidden_dim, input_dim)]
    for _ in range(n_layers - 1):
        dims.append((hidden_dim, hidden_dim))
    dims.append((input_dim, hidden_dim))

    weights, biases = [], []
    for dout, din in dims:
        key, kw, kb = jax.random.split(key, 3)
        bound = 1.0 / math.sqrt(din)
        weights.append(jax.random.uniform(kw, (dout, din), jnp.float32,
                                          -bound, bound))
        biases.append(jax.random.uniform(kb, (dout,), jnp.float32,
                                         -bound, bound))
    return weights, biases


def reference_forward(x, weights, biases):
    """Plain-JAX f32 reference matching the PyTorch forward exactly."""
    s = x.shape
    h = x.reshape(-1, s[-1])
    for i, (w, b) in enumerate(zip(weights, biases)):
        h = h @ w.T + b
        if i < len(weights) - 1:
            h = jnp.where(h > 0, h, LEAKY_SLOPE * h)
    return h.reshape(s[:-1] + (-1,))


if __name__ == "__main__":
    input_dim = 4
    hidden_dim = 32
    n_layers = 3
    n_timesteps = 8
    n_cells = 16

    key = jax.random.PRNGKey(0)
    key, kx = jax.random.split(key)
    x = jax.random.normal(kx, (n_timesteps, n_cells, input_dim), jnp.float32)

    weights, biases = init_params(key, input_dim, hidden_dim, n_layers)

    out = ux_forward(x, weights, biases)               # N = 128 -> 1 grid step
    out = jax.block_until_ready(out)

    ref = reference_forward(x, weights, biases)
    assert out.shape == (n_timesteps, n_cells, input_dim)
    # bf16 matmul inputs with f32 accumulation -> relaxed tolerance vs f32 ref.
    max_err = float(jnp.max(jnp.abs(out - ref)))
    assert jnp.allclose(out, ref, atol=3e-2, rtol=3e-2), max_err

    print("KERNEL_OK")
</pallas_src>

<mosaic_0001>
module attributes {stable_mosaic.version = 11 : i64} {
  func.func @kernel(%arg0: i32, %arg1: memref<4x128xf32, #tpu.memory_space<vmem>>, %arg2: memref<32x4xbf16, #tpu.memory_space<vmem>>, %arg3: memref<32x1xf32, #tpu.memory_space<vmem>>, %arg4: memref<32x32xbf16, #tpu.memory_space<vmem>>, %arg5: memref<32x1xf32, #tpu.memory_space<vmem>>, %arg6: memref<32x32xbf16, #tpu.memory_space<vmem>>, %arg7: memref<32x1xf32, #tpu.memory_space<vmem>>, %arg8: memref<4x32xbf16, #tpu.memory_space<vmem>>, %arg9: memref<4x1xf32, #tpu.memory_space<vmem>>, %arg10: memref<4x128xf32, #tpu.memory_space<vmem>>) attributes {dimension_semantics = [#tpu.dimension_semantics<parallel>], iteration_bounds = array<i64: 1>, scalar_prefetch = 0 : i64, scratch_operands = 0 : i64, tpu.core_type = #tpu.core_type<tc>, window_params = [{transform_indices = @transform_0, window_bounds = array<i64: 4, 128>}, {pipeline_mode = #tpu.pipeline_mode<synchronous>, transform_indices = @transform_1, window_bounds = array<i64: 32, 4>}, {pipeline_mode = #tpu.pipeline_mode<synchronous>, transform_indices = @transform_2, window_bounds = array<i64: 32, 1>}, {pipeline_mode = #tpu.pipeline_mode<synchronous>, transform_indices = @transform_3, window_bounds = array<i64: 32, 32>}, {pipeline_mode = #tpu.pipeline_mode<synchronous>, transform_indices = @transform_4, window_bounds = array<i64: 32, 1>}, {pipeline_mode = #tpu.pipeline_mode<synchronous>, transform_indices = @transform_5, window_bounds = array<i64: 32, 32>}, {pipeline_mode = #tpu.pipeline_mode<synchronous>, transform_indices = @transform_6, window_bounds = array<i64: 32, 1>}, {pipeline_mode = #tpu.pipeline_mode<synchronous>, transform_indices = @transform_7, window_bounds = array<i64: 4, 32>}, {pipeline_mode = #tpu.pipeline_mode<synchronous>, transform_indices = @transform_8, window_bounds = array<i64: 4, 1>}, {transform_indices = @transform_9, window_bounds = array<i64: 4, 128>}]} {
    %c0 = arith.constant 0 : index
    %c0_0 = arith.constant 0 : index
    %0 = vector.load %arg1[%c0, %c0_0] : memref<4x128xf32, #tpu.memory_space<vmem>>, vector<4x128xf32>
    %c0_1 = arith.constant 0 : index
    %c0_2 = arith.constant 0 : index
    %1 = vector.load %arg2[%c0_1, %c0_2] : memref<32x4xbf16, #tpu.memory_space<vmem>>, vector<32x4xbf16>
    %c0_3 = arith.constant 0 : index
    %c0_4 = arith.constant 0 : index
    %2 = vector.load %arg3[%c0_3, %c0_4] : memref<32x1xf32, #tpu.memory_space<vmem>>, vector<32x1xf32>
    %3 = arith.truncf %0 : vector<4x128xf32> to vector<4x128xbf16>
    %cst = arith.constant dense<0.000000e+00> : vector<32x128xf32>
    %4 = tpu.matmul %1, %3, %cst {dimension_numbers = #tpu.dot_dimension_numbers<[1], [0], [0], [1], [0, 0, 1, 1], [], []>} : vector<32x4xbf16>, vector<4x128xbf16>, vector<32x128xf32> -> vector<32x128xf32>
    %5 = vector.broadcast %2 : vector<32x1xf32> to vector<32x128xf32>
    %6 = arith.addf %4, %5 : vector<32x128xf32>
    %cst_5 = arith.constant 0.00999999977 : f32
    %7 = vector.broadcast %cst_5 : f32 to vector<32x128xf32>
    %8 = arith.mulf %7, %6 : vector<32x128xf32>
    %9 = arith.maximumf %6, %8 : vector<32x128xf32>
    %c0_6 = arith.constant 0 : index
    %c0_7 = arith.constant 0 : index
    %10 = vector.load %arg4[%c0_6, %c0_7] : memref<32x32xbf16, #tpu.memory_space<vmem>>, vector<32x32xbf16>
    %c0_8 = arith.constant 0 : index
    %c0_9 = arith.constant 0 : index
    %11 = vector.load %arg5[%c0_8, %c0_9] : memref<32x1xf32, #tpu.memory_space<vmem>>, vector<32x1xf32>
    %12 = arith.truncf %9 : vector<32x128xf32> to vector<32x128xbf16>
    %cst_10 = arith.constant dense<0.000000e+00> : vector<32x128xf32>
    %13 = tpu.matmul %10, %12, %cst_10 {dimension_numbers = #tpu.dot_dimension_numbers<[1], [0], [0], [1], [0, 0, 1, 1], [], []>} : vector<32x32xbf16>, vector<32x128xbf16>, vector<32x128xf32> -> vector<32x128xf32>
    %14 = vector.broadcast %11 : vector<32x1xf32> to vector<32x128xf32>
    %15 = arith.addf %13, %14 : vector<32x128xf32>
    %cst_11 = arith.constant 0.00999999977 : f32
    %16 = vector.broadcast %cst_11 : f32 to vector<32x128xf32>
    %17 = arith.mulf %16, %15 : vector<32x128xf32>
    %18 = arith.maximumf %15, %17 : vector<32x128xf32>
    %c0_12 = arith.constant 0 : index
    %c0_13 = arith.constant 0 : index
    %19 = vector.load %arg6[%c0_12, %c0_13] : memref<32x32xbf16, #tpu.memory_space<vmem>>, vector<32x32xbf16>
    %c0_14 = arith.constant 0 : index
    %c0_15 = arith.constant 0 : index
    %20 = vector.load %arg7[%c0_14, %c0_15] : memref<32x1xf32, #tpu.memory_space<vmem>>, vector<32x1xf32>
    %21 = arith.truncf %18 : vector<32x128xf32> to vector<32x128xbf16>
    %cst_16 = arith.constant dense<0.000000e+00> : vector<32x128xf32>
    %22 = tpu.matmul %19, %21, %cst_16 {dimension_numbers = #tpu.dot_dimension_numbers<[1], [0], [0], [1], [0, 0, 1, 1], [], []>} : vector<32x32xbf16>, vector<32x128xbf16>, vector<32x128xf32> -> vector<32x128xf32>
    %23 = vector.broadcast %20 : vector<32x1xf32> to vector<32x128xf32>
    %24 = arith.addf %22, %23 : vector<32x128xf32>
    %cst_17 = arith.constant 0.00999999977 : f32
    %25 = vector.broadcast %cst_17 : f32 to vector<32x128xf32>
    %26 = arith.mulf %25, %24 : vector<32x128xf32>
    %27 = arith.maximumf %24, %26 : vector<32x128xf32>
    %c0_18 = arith.constant 0 : index
    %c0_19 = arith.constant 0 : index
    %28 = vector.load %arg8[%c0_18, %c0_19] : memref<4x32xbf16, #tpu.memory_space<vmem>>, vector<4x32xbf16>
    %c0_20 = arith.constant 0 : index
    %c0_21 = arith.constant 0 : index
    %29 = vector.load %arg9[%c0_20, %c0_21] : memref<4x1xf32, #tpu.memory_space<vmem>>, vector<4x1xf32>
    %30 = arith.truncf %27 : vector<32x128xf32> to vector<32x128xbf16>
    %cst_22 = arith.constant dense<0.000000e+00> : vector<4x128xf32>
    %31 = tpu.matmul %28, %30, %cst_22 {dimension_numbers = #tpu.dot_dimension_numbers<[1], [0], [0], [1], [0, 0, 1, 1], [], []>} : vector<4x32xbf16>, vector<32x128xbf16>, vector<4x128xf32> -> vector<4x128xf32>
    %32 = vector.broadcast %29 : vector<4x1xf32> to vector<4x128xf32>
    %33 = arith.addf %31, %32 : vector<4x128xf32>
    %c0_23 = arith.constant 0 : index
    %c0_24 = arith.constant 0 : index
    %34 = vector.load %arg10[%c0_23, %c0_24] : memref<4x128xf32, #tpu.memory_space<vmem>>, vector<4x128xf32>
    tpu.vector_store %arg10[%c0_23, %c0_24], %33 {strides = array<i32>} : memref<4x128xf32, #tpu.memory_space<vmem>>, vector<4x128xf32>,
    return
  }
  func.func @transform_0(%arg0: i32) -> (i32, i32) {
    %c0_i32 = arith.constant 0 : i32
    %c0_i32_0 = arith.constant 0 : i32
    return %c0_i32, %arg0 : i32, i32
  }
  func.func @transform_1(%arg0: i32) -> (i32, i32) {
    %c0_i32 = arith.constant 0 : i32
    %c0_i32_0 = arith.constant 0 : i32
    %c0_i32_1 = arith.constant 0 : i32
    return %c0_i32, %c0_i32_0 : i32, i32
  }
  func.func @transform_2(%arg0: i32) -> (i32, i32) {
    %c0_i32 = arith.constant 0 : i32
    %c0_i32_0 = arith.constant 0 : i32
    %c0_i32_1 = arith.constant 0 : i32
    return %c0_i32, %c0_i32_0 : i32, i32
  }
  func.func @transform_3(%arg0: i32) -> (i32, i32) {
    %c0_i32 = arith.constant 0 : i32
    %c0_i32_0 = arith.constant 0 : i32
    %c0_i32_1 = arith.constant 0 : i32
    return %c0_i32, %c0_i32_0 : i32, i32
  }
  func.func @transform_4(%arg0: i32) -> (i32, i32) {
    %c0_i32 = arith.constant 0 : i32
    %c0_i32_0 = arith.constant 0 : i32
    %c0_i32_1 = arith.constant 0 : i32
    return %c0_i32, %c0_i32_0 : i32, i32
  }
  func.func @transform_5(%arg0: i32) -> (i32, i32) {
    %c0_i32 = arith.constant 0 : i32
    %c0_i32_0 = arith.constant 0 : i32
    %c0_i32_1 = arith.constant 0 : i32
    return %c0_i32, %c0_i32_0 : i32, i32
  }
  func.func @transform_6(%arg0: i32) -> (i32, i32) {
    %c0_i32 = arith.constant 0 : i32
    %c0_i32_0 = arith.constant 0 : i32
    %c0_i32_1 = arith.constant 0 : i32
    return %c0_i32, %c0_i32_0 : i32, i32
  }
  func.func @transform_7(%arg0: i32) -> (i32, i32) {
    %c0_i32 = arith.constant 0 : i32
    %c0_i32_0 = arith.constant 0 : i32
    %c0_i32_1 = arith.constant 0 : i32
    return %c0_i32, %c0_i32_0 : i32, i32
  }
  func.func @transform_8(%arg0: i32) -> (i32, i32) {
    %c0_i32 = arith.constant 0 : i32
    %c0_i32_0 = arith.constant 0 : i32
    %c0_i32_1 = arith.constant 0 : i32
    return %c0_i32, %c0_i32_0 : i32, i32
  }
  func.func @transform_9(%arg0: i32) -> (i32, i32) {
    %c0_i32 = arith.constant 0 : i32
    %c0_i32_0 = arith.constant 0 : i32
    return %c0_i32, %arg0 : i32, i32
  }
}

</mosaic_0001>

<llo_original>
// kernel: tpu_custom_call.1
$region0: #{tpu_custom_call.1}
  #allocation0 [shape = 'u32[]', space=smem, size = 0x4, offset = 0x4, fixed_abs, tag = 'smem constant byte address 0x4 - core index']
  #allocation1 [shape = 'u32[144,128]{1,0:T(1,128)}', space=vmem, size = 0x12000, scoped, tag = 'internal scratch']
  %s0 = inlined_call_operand.vmem [shape: f32[4,128], index: 0, kind: input, shape index: {}]
  %s1 = inlined_call_operand.vmem [shape: bf16[32,4], index: 1, kind: input, shape index: {}]
  %s2 = inlined_call_operand.vmem [shape: f32[32,1], index: 2, kind: input, shape index: {}]
  %s3 = inlined_call_operand.vmem [shape: bf16[32,32], index: 3, kind: input, shape index: {}]
  %s4 = inlined_call_operand.vmem [shape: f32[32,1], index: 4, kind: input, shape index: {}]
  %s5 = inlined_call_operand.vmem [shape: bf16[32,32], index: 5, kind: input, shape index: {}]
  %s6 = inlined_call_operand.vmem [shape: f32[32,1], index: 6, kind: input, shape index: {}]
  %s7 = inlined_call_operand.vmem [shape: bf16[4,32], index: 7, kind: input, shape index: {}]
  %s8 = inlined_call_operand.vmem [shape: f32[4,1], index: 8, kind: input, shape index: {}]
  %s9 = inlined_call_operand.hbm [shape: f32[4,128], index: 9, kind: output, shape index: {}]
  %s10 = sld [smem:[#allocation0]]
  $region46: #{tpu_custom_call.1} parent=0
    _
  %s12 = ssub.s32 1, %s10
  %s13 = scalar_select 0, %s12, %s10
  $region1: #{tpu_custom_call.1} parent=0
    #allocation2 [shape = 'u8[2048]{0}', space=vmem, size = 0x800, scoped, tag = 'output window, operand 0, single buffered']
    #allocation3 [shape = 's32[1]{0}', space=sflag, size = 0x4, scoped, tag = 'scoped memory for tpu_custom_call.1']
    %14 = vsyncpa [#allocation3], 0
    // Predicated region
    $region2: #{tpu_custom_call.1} parent=1 // pred_check
      _
    $region3: #{tpu_custom_call.1} parent=1 // pred_check_branch
      %16 = sbr.rel (0) target = $region5
    $region4: #{tpu_custom_call.1} parent=1 // pred_region
      _
    $region5: #{tpu_custom_call.1} parent=1 // pred_fallthru
      _
    // Predicated region
    $region6: #{tpu_custom_call.1} parent=1 // pred_check
      _
    $region7: #{tpu_custom_call.1} parent=1 // pred_check_branch
      %18 = sbr.rel (0) target = $region9
    $region8: #{tpu_custom_call.1} parent=1 // pred_region
      _
    $region9: #{tpu_custom_call.1} parent=1 // pred_fallthru
      _
    // Predicated region
    $region10: #{tpu_custom_call.1} parent=1 // pred_check
      _
    $region11: #{tpu_custom_call.1} parent=1 // pred_check_branch
      %20 = sbr.rel (0) target = $region13
    $region12: #{tpu_custom_call.1} parent=1 // pred_region
      _
    $region13: #{tpu_custom_call.1} parent=1 // pred_fallthru
      _
    // Predicated region
    $region14: #{tpu_custom_call.1} parent=1 // pred_check
      _
    $region15: #{tpu_custom_call.1} parent=1 // pred_check_branch
      %22 = sbr.rel (0) target = $region17
    $region16: #{tpu_custom_call.1} parent=1 // pred_region
      _
    $region17: #{tpu_custom_call.1} parent=1 // pred_fallthru
      _
    // Predicated region
    $region18: #{tpu_custom_call.1} parent=1 // pred_check
      _
    $region19: #{tpu_custom_call.1} parent=1 // pred_check_branch
      %24 = sbr.rel (0) target = $region21
    $region20: #{tpu_custom_call.1} parent=1 // pred_region
      _
    $region21: #{tpu_custom_call.1} parent=1 // pred_fallthru
      _
    // Predicated region
    $region22: #{tpu_custom_call.1} parent=1 // pred_check
      _
    $region23: #{tpu_custom_call.1} parent=1 // pred_check_branch
      %26 = sbr.rel (0) target = $region25
    $region24: #{tpu_custom_call.1} parent=1 // pred_region
      _
    $region25: #{tpu_custom_call.1} parent=1 // pred_fallthru
      _
    // Predicated region
    $region26: #{tpu_custom_call.1} parent=1 // pred_check
      _
    $region27: #{tpu_custom_call.1} parent=1 // pred_check_branch
      %28 = sbr.rel (0) target = $region29
    $region28: #{tpu_custom_call.1} parent=1 // pred_region
      _
    $region29: #{tpu_custom_call.1} parent=1 // pred_fallthru
      _
    // Predicated region
    $region30: #{tpu_custom_call.1} parent=1 // pred_check
      _
    $region31: #{tpu_custom_call.1} parent=1 // pred_check_branch
      %30 = sbr.rel (0) target = $region33
    $region32: #{tpu_custom_call.1} parent=1 // pred_region
      _
    $region33: #{tpu_custom_call.1} parent=1 // pred_fallthru
      _
    // Predicated region
    $region34: #{tpu_custom_call.1} parent=1 // pred_check
      _
    $region35: #{tpu_custom_call.1} parent=1 // pred_check_branch
      %32 = sbr.rel (0) target = $region37
    $region36: #{tpu_custom_call.1} parent=1 // pred_region
      _
    $region37: #{tpu_custom_call.1} parent=1 // pred_fallthru
      _
    %v34 = vld [vmem:[%s0] sm:$0xf]
    %v35 = vld [vmem:[%s1] sm:$0xf]
    %v36 = vld [vmem:[%s1 + $0x4] sm:$0xf]
    %v37 = vld [vmem:[%s1 + $0x8] sm:$0xf]
    %v38 = vld [vmem:[%s1 + $0xc] sm:$0xf]
    %v39 = vld [vmem:[%s2] sm:$0xff]
    %v40 = vld [vmem:[%s2 + $0x8] sm:$0xff]
    %v41 = vld [vmem:[%s2 + $0x10] sm:$0xff]
    %v42 = vld [vmem:[%s2 + $0x18] sm:$0xff]
    %v43 = vpack.c.bf16 %v34, %v34
    %45 = vset.pattern.permute.xlu0 0
    %46 = vperm.xlu0 %45, %v39
    %v47 = vpop.permute.xlu0 %46
    %50 = vset.pattern.permute.xlu0 0
    %51 = vperm.xlu0 %50, %v40
    %v52 = vpop.permute.xlu0 %51
    %55 = vset.pattern.permute.xlu0 0
    %56 = vperm.xlu0 %55, %v41
    %v57 = vpop.permute.xlu0 %56
    %60 = vset.pattern.permute.xlu0 0
    %61 = vperm.xlu0 %60, %v42
    %v62 = vpop.permute.xlu0 %61
    %v68 = vunpack.c.l.b16 %v35
    %v69 = vunpack.c.l.b16 %v36
    %v70 = vunpack.c.l.b16 %v37
    %v71 = vunpack.c.l.b16 %v38
    %v72 = vpack.c.b16 %v69, %v68
    %v73 = vpack.c.b16 %v71, %v70
    %vm74 = vcmask 31744
    %v76 = vsel %vm74, %v72, 0
    %v79 = vsel %vm74, %v73, 0
    %vm81 = vcmask 1041408
    %v83 = vsel %vm81, %v43, 0
    %85 = vmatprep.subr.bf16.mxu0 0
    %86 = vmatpush1.bf16.msra.mxu0 %v83
    %87 = vmatprep.subr.bf16.mxu0 0
    %88 = vmatpush1.bf16.msra.mxu0 0
    %89 = vmatprep.subr.bf16.mxu0 0
    %90 = vmatpush1.bf16.msra.mxu0 0
    %91 = vmatprep.subr.bf16.mxu0 0
    %92 = vmatpush1.bf16.msra.mxu0 0
    %93 = vmatprep.subr.bf16.mxu0 0
    %94 = vmatpush1.bf16.msra.mxu0 0
    %95 = vmatprep.subr.bf16.mxu0 0
    %96 = vmatpush1.bf16.msra.mxu0 0
    %97 = vmatprep.subr.bf16.mxu0 0
    %98 = vmatpush1.bf16.msra.mxu0 0
    %99 = vmatprep.subr.bf16.mxu0 0
    %100 = vmatpush1.bf16.msra.mxu0 0
    %101 = vmatprep.subr.bf16.mxu0 0
    %102 = vmatpush1.bf16.msra.mxu0 0
    %103 = vmatprep.subr.bf16.mxu0 0
    %104 = vmatpush1.bf16.msra.mxu0 0
    %105 = vmatprep.subr.bf16.mxu0 0
    %106 = vmatpush1.bf16.msra.mxu0 0
    %107 = vmatprep.subr.bf16.mxu0 0
    %108 = vmatpush1.bf16.msra.mxu0 0
    %109 = vmatprep.subr.bf16.mxu0 0
    %110 = vmatpush1.bf16.msra.mxu0 0
    %111 = vmatprep.subr.bf16.mxu0 0
    %112 = vmatpush1.bf16.msra.mxu0 0
    %113 = vmatprep.subr.bf16.mxu0 0
    %114 = vmatpush1.bf16.msra.mxu0 0
    %115 = vmatprep.subr.bf16.mxu0 0
    %116 = vmatpush1.bf16.msra.mxu0 0
    %117 = vmatprep.mubr.bf16.mxu0 0
    %118 = vmatmul.mubr.bf16.gmra.mrb[0].mxu0 %v76
    %v119 = vpop.f32.mrb[0].mxu0
    %v120 = vadd.f32 %v47, %v119
    %v121 = vpop.f32.mrb[0].mxu0
    %v122 = vpop.f32.mrb[0].mxu0
    %v123 = vadd.f32 %v52, %v122
    %v124 = vpop.f32.mrb[0].mxu0
    %125 = vmatprep.mubr.bf16.mxu0 0
    %126 = vmatmul.mubr.bf16.gmra.mrb[0].mxu0 %v79
    %v127 = vpop.f32.mrb[0].mxu0
    %v128 = vadd.f32 %v57, %v127
    %v129 = vpop.f32.mrb[0].mxu0
    %v130 = vpop.f32.mrb[0].mxu0
    %v131 = vadd.f32 %v62, %v130
    %v132 = vpop.f32.mrb[0].mxu0
    %133 = vdwg.mxu0
    %v134 = vmul.f32 %v120, 0.01
    %v135 = vmul.f32 %v123, 0.01
    %v136 = vmul.f32 %v128, 0.01
    %v137 = vmul.f32 %v131, 0.01
    %v138 = vmax.f32 %v120, %v134
    %v139 = vmax.f32 %v123, %v135
    %v140 = vmax.f32 %v128, %v136
    %v141 = vmax.f32 %v131, %v137
    %v142 = vld [vmem:[%s3] sm:$0xf]
    %v143 = vld [vmem:[%s3 + $0x4] sm:$0xf]
    %v144 = vld [vmem:[%s3 + $0x8] sm:$0xf]
    %v145 = vld [vmem:[%s3 + $0xc] sm:$0xf]
    %v146 = vld [vmem:[%s4] sm:$0xff]
    %v147 = vld [vmem:[%s4 + $0x8] sm:$0xff]
    %v148 = vld [vmem:[%s4 + $0x10] sm:$0xff]
    %v149 = vld [vmem:[%s4 + $0x18] sm:$0xff]
    %v150 = vpack.c.bf16 %v139, %v138
    %v151 = vpack.c.bf16 %v141, %v140
    %153 = vset.pattern.permute.xlu0 0
    %154 = vperm.xlu0 %153, %v146
    %v155 = vpop.permute.xlu0 %154
    %158 = vset.pattern.permute.xlu0 0
    %159 = vperm.xlu0 %158, %v147
    %v160 = vpop.permute.xlu0 %159
    %163 = vset.pattern.permute.xlu0 0
    %164 = vperm.xlu0 %163, %v148
    %v165 = vpop.permute.xlu0 %164
    %168 = vset.pattern.permute.xlu0 0
    %169 = vperm.xlu0 %168, %v149
    %v170 = vpop.permute.xlu0 %169
    %v176 = vunpack.c.l.b16 %v142
    %v177 = vunpack.c.l.b16 %v143
    %v178 = vunpack.c.l.b16 %v144
    %v179 = vunpack.c.l.b16 %v145
    %v180 = vpack.c.b16 %v177, %v176
    %v181 = vpack.c.b16 %v179, %v178
    %vm182 = vcmask 261120
    %v184 = vsel %vm182, %v180, 0
    %v187 = vsel %vm182, %v181, 0
    %189 = vmatprep.subr.bf16.mxu0 0
    %190 = vmatpush1.bf16.msra.mxu0 %v150
    %191 = vmatprep.subr.bf16.mxu0 0
    %192 = vmatpush1.bf16.msra.mxu0 %v151
    %193 = vmatprep.subr.bf16.mxu0 0
    %194 = vmatpush1.bf16.msra.mxu0 0
    %195 = vmatprep.subr.bf16.mxu0 0
    %196 = vmatpush1.bf16.msra.mxu0 0
    %197 = vmatprep.subr.bf16.mxu0 0
    %198 = vmatpush1.bf16.msra.mxu0 0
    %199 = vmatprep.subr.bf16.mxu0 0
    %200 = vmatpush1.bf16.msra.mxu0 0
    %201 = vmatprep.subr.bf16.mxu0 0
    %202 = vmatpush1.bf16.msra.mxu0 0
    %203 = vmatprep.subr.bf16.mxu0 0
    %204 = vmatpush1.bf16.msra.mxu0 0
    %205 = vmatprep.subr.bf16.mxu0 0
    %206 = vmatpush1.bf16.msra.mxu0 0
    %207 = vmatprep.subr.bf16.mxu0 0
    %208 = vmatpush1.bf16.msra.mxu0 0
    %209 = vmatprep.subr.bf16.mxu0 0
    %210 = vmatpush1.bf16.msra.mxu0 0
    %211 = vmatprep.subr.bf16.mxu0 0
    %212 = vmatpush1.bf16.msra.mxu0 0
    %213 = vmatprep.subr.bf16.mxu0 0
    %214 = vmatpush1.bf16.msra.mxu0 0
    %215 = vmatprep.subr.bf16.mxu0 0
    %216 = vmatpush1.bf16.msra.mxu0 0
    %217 = vmatprep.subr.bf16.mxu0 0
    %218 = vmatpush1.bf16.msra.mxu0 0
    %219 = vmatprep.subr.bf16.mxu0 0
    %220 = vmatpush1.bf16.msra.mxu0 0
    %221 = vmatprep.mubr.bf16.mxu0 0
    %222 = vmatmul.mubr.bf16.gmra.mrb[0].mxu0 %v184
    %v223 = vpop.f32.mrb[0].mxu0
    %v224 = vadd.f32 %v155, %v223
    %v225 = vpop.f32.mrb[0].mxu0
    %v226 = vpop.f32.mrb[0].mxu0
    %v227 = vadd.f32 %v160, %v226
    %v228 = vpop.f32.mrb[0].mxu0
    %229 = vmatprep.mubr.bf16.mxu0 0
    %230 = vmatmul.mubr.bf16.gmra.mrb[0].mxu0 %v187
    %v231 = vpop.f32.mrb[0].mxu0
    %v232 = vadd.f32 %v165, %v231
    %v233 = vpop.f32.mrb[0].mxu0
    %v234 = vpop.f32.mrb[0].mxu0
    %v235 = vadd.f32 %v170, %v234
    %v236 = vpop.f32.mrb[0].mxu0
    %237 = vdwg.mxu0
    %v238 = vmul.f32 %v224, 0.01
    %v239 = vmul.f32 %v227, 0.01
    %v240 = vmul.f32 %v232, 0.01
    %v241 = vmul.f32 %v235, 0.01
    %v242 = vmax.f32 %v224, %v238
    %v243 = vmax.f32 %v227, %v239
    %v244 = vmax.f32 %v232, %v240
    %v245 = vmax.f32 %v235, %v241
    %v246 = vld [vmem:[%s5] sm:$0xf]
    %v247 = vld [vmem:[%s5 + $0x4] sm:$0xf]
    %v248 = vld [vmem:[%s5 + $0x8] sm:$0xf]
    %v249 = vld [vmem:[%s5 + $0xc] sm:$0xf]
    %v250 = vld [vmem:[%s6] sm:$0xff]
    %v251 = vld [vmem:[%s6 + $0x8] sm:$0xff]
    %v252 = vld [vmem:[%s6 + $0x10] sm:$0xff]
    %v253 = vld [vmem:[%s6 + $0x18] sm:$0xff]
    %v254 = vpack.c.bf16 %v243, %v242
    %v255 = vpack.c.bf16 %v245, %v244
    %257 = vset.pattern.permute.xlu0 0
    %258 = vperm.xlu0 %257, %v250
    %v259 = vpop.permute.xlu0 %258
    %262 = vset.pattern.permute.xlu0 0
    %263 = vperm.xlu0 %262, %v251
    %v264 = vpop.permute.xlu0 %263
    %267 = vset.pattern.permute.xlu0 0
    %268 = vperm.xlu0 %267, %v252
    %v269 = vpop.permute.xlu0 %268
    %272 = vset.pattern.permute.xlu0 0
    %273 = vperm.xlu0 %272, %v253
    %v274 = vpop.permute.xlu0 %273
    %v280 = vunpack.c.l.b16 %v246
    %v281 = vunpack.c.l.b16 %v247
    %v282 = vunpack.c.l.b16 %v248
    %v283 = vunpack.c.l.b16 %v249
    %v284 = vpack.c.b16 %v281, %v280
    %v285 = vpack.c.b16 %v283, %v282
    %v287 = vsel %vm182, %v284, 0
    %v290 = vsel %vm182, %v285, 0
    %292 = vmatprep.subr.bf16.mxu0 0
    %293 = vmatpush1.bf16.msra.mxu0 %v254
    %294 = vmatprep.subr.bf16.mxu0 0
    %295 = vmatpush1.bf16.msra.mxu0 %v255
    %296 = vmatprep.subr.bf16.mxu0 0
    %297 = vmatpush1.bf16.msra.mxu0 0
    %298 = vmatprep.subr.bf16.mxu0 0
    %299 = vmatpush1.bf16.msra.mxu0 0
    %300 = vmatprep.subr.bf16.mxu0 0
    %301 = vmatpush1.bf16.msra.mxu0 0
    %302 = vmatprep.subr.bf16.mxu0 0
    %303 = vmatpush1.bf16.msra.mxu0 0
    %304 = vmatprep.subr.bf16.mxu0 0
    %305 = vmatpush1.bf16.msra.mxu0 0
    %306 = vmatprep.subr.bf16.mxu0 0
    %307 = vmatpush1.bf16.msra.mxu0 0
    %308 = vmatprep.subr.bf16.mxu0 0
    %309 = vmatpush1.bf16.msra.mxu0 0
    %310 = vmatprep.subr.bf16.mxu0 0
    %311 = vmatpush1.bf16.msra.mxu0 0
    %312 = vmatprep.subr.bf16.mxu0 0
    %313 = vmatpush1.bf16.msra.mxu0 0
    %314 = vmatprep.subr.bf16.mxu0 0
    %315 = vmatpush1.bf16.msra.mxu0 0
    %316 = vmatprep.subr.bf16.mxu0 0
    %317 = vmatpush1.bf16.msra.mxu0 0
    %318 = vmatprep.subr.bf16.mxu0 0
    %319 = vmatpush1.bf16.msra.mxu0 0
    %320 = vmatprep.subr.bf16.mxu0 0
    %321 = vmatpush1.bf16.msra.mxu0 0
    %322 = vmatprep.subr.bf16.mxu0 0
    %323 = vmatpush1.bf16.msra.mxu0 0
    %324 = vmatprep.mubr.bf16.mxu0 0
    %325 = vmatmul.mubr.bf16.gmra.mrb[0].mxu0 %v287
    %v326 = vpop.f32.mrb[0].mxu0
    %v327 = vadd.f32 %v259, %v326
    %v328 = vpop.f32.mrb[0].mxu0
    %v329 = vpop.f32.mrb[0].mxu0
    %v330 = vadd.f32 %v264, %v329
    %v331 = vpop.f32.mrb[0].mxu0
    %332 = vmatprep.mubr.bf16.mxu0 0
    %333 = vmatmul.mubr.bf16.gmra.mrb[0].mxu0 %v290
    %v334 = vpop.f32.mrb[0].mxu0
    %v335 = vadd.f32 %v269, %v334
    %v336 = vpop.f32.mrb[0].mxu0
    %v337 = vpop.f32.mrb[0].mxu0
    %v338 = vadd.f32 %v274, %v337
    %v339 = vpop.f32.mrb[0].mxu0
    %340 = vdwg.mxu0
    %v341 = vmul.f32 %v327, 0.01
    %v342 = vmul.f32 %v330, 0.01
    %v343 = vmul.f32 %v335, 0.01
    %v344 = vmul.f32 %v338, 0.01
    %v345 = vmax.f32 %v327, %v341
    %v346 = vmax.f32 %v330, %v342
    %v347 = vmax.f32 %v335, %v343
    %v348 = vmax.f32 %v338, %v344
    %v349 = vld [vmem:[%s7] sm:$0x3]
    %v350 = vld [vmem:[%s8] sm:$0xf]
    %v351 = vpack.c.bf16 %v346, %v345
    %v352 = vpack.c.bf16 %v348, %v347
    %354 = vset.pattern.permute.xlu0 0
    %355 = vperm.xlu0 %354, %v350
    %v356 = vpop.permute.xlu0 %355
    %v359 = vsel %vm182, %v349, 0
    %361 = vmatprep.subr.bf16.mxu0 0
    %362 = vmatpush1.bf16.msra.mxu0 %v351
    %363 = vmatprep.subr.bf16.mxu0 0
    %364 = vmatpush1.bf16.msra.mxu0 %v352
    %365 = vmatprep.subr.bf16.mxu0 0
    %366 = vmatpush1.bf16.msra.mxu0 0
    %367 = vmatprep.subr.bf16.mxu0 0
    %368 = vmatpush1.bf16.msra.mxu0 0
    %369 = vmatprep.subr.bf16.mxu0 0
    %370 = vmatpush1.bf16.msra.mxu0 0
    %371 = vmatprep.subr.bf16.mxu0 0
    %372 = vmatpush1.bf16.msra.mxu0 0
    %373 = vmatprep.subr.bf16.mxu0 0
    %374 = vmatpush1.bf16.msra.mxu0 0
    %375 = vmatprep.subr.bf16.mxu0 0
    %376 = vmatpush1.bf16.msra.mxu0 0
    %377 = vmatprep.subr.bf16.mxu0 0
    %378 = vmatpush1.bf16.msra.mxu0 0
    %379 = vmatprep.subr.bf16.mxu0 0
    %380 = vmatpush1.bf16.msra.mxu0 0
    %381 = vmatprep.subr.bf16.mxu0 0
    %382 = vmatpush1.bf16.msra.mxu0 0
    %383 = vmatprep.subr.bf16.mxu0 0
    %384 = vmatpush1.bf16.msra.mxu0 0
    %385 = vmatprep.subr.bf16.mxu0 0
    %386 = vmatpush1.bf16.msra.mxu0 0
    %387 = vmatprep.subr.bf16.mxu0 0
    %388 = vmatpush1.bf16.msra.mxu0 0
    %389 = vmatprep.subr.bf16.mxu0 0
    %390 = vmatpush1.bf16.msra.mxu0 0
    %391 = vmatprep.subr.bf16.mxu0 0
    %392 = vmatpush1.bf16.msra.mxu0 0
    %393 = vmatprep.mubr.bf16.mxu0 0
    %394 = vmatmul.mubr.bf16.gmra.mrb[0].mxu0 %v359
    %v395 = vpop.f32.mrb[0].mxu0
    %v396 = vadd.f32 %v356, %v395
    %v397 = vpop.f32.mrb[0].mxu0
    %v398 = vpop.f32.mrb[0].mxu0
    %v399 = vpop.f32.mrb[0].mxu0
    %400 = vdwg.mxu0
    %401 = vst [vmem:[#allocation2] sm:$0xf] %v396
    // Predicated region
    $region38: #{tpu_custom_call.1} parent=1 // pred_check
      _
    $region39: #{tpu_custom_call.1} parent=1 // pred_check_branch
      %403 = sbr.rel (0) target = $region41
    $region40: #{tpu_custom_call.1} parent=1 // pred_region
      %s405 = ssub.s32 64, 64
      %406 = vsyncadd [#allocation3], %s405
      %s408 = sshll.u32 [#allocation2], 4
      %s409 = int_to_ptr.vmem [resolvable:$true] %s408
      %411 = dma.vmem_to_hbm [thread:$0]  %s409, 64, %s9, [#allocation3]
    $region41: #{tpu_custom_call.1} parent=1 // pred_fallthru
      _
    // Predicated region
    $region42: #{tpu_custom_call.1} parent=1 // pred_check
      _
    $region43: #{tpu_custom_call.1} parent=1 // pred_check_branch
      %413 = sbr.rel (0) target = $region45
    $region44: #{tpu_custom_call.1} parent=1 // pred_region
      %414 = dma.done [#allocation3], 64
    $region45: #{tpu_custom_call.1} parent=1 // pred_fallthru
      _
    %415 = vsyncpa [#allocation3], 1

</llo_original>
